<compile_context>
chip_gen: v7x
topology: tpu7x:2x2x1
jax: 0.10.0
libtpu: 0.0.40
codegen_flags: <defaults>
</compile_context>

<pallas_src>
import jax
import jax.numpy as jnp
from jax.experimental import pallas as pl
from jax.experimental.pallas import tpu as pltpu


HIDDEN = 128  # hidden width of the discriminator (fixed by the module)


def discriminator_kernel(x_ref, w1_ref, bw_ref, b2_ref, o_ref):
    # x_ref : (TB, D)  streamed batch tile of x (row-major, original dtype)
    # w1_ref: (D, H)   layer-1 weight, resident in VMEM
    # bw_ref: (2, H)   row 0 = b1, row 1 = w2 (f32, resident)
    # b2_ref: (1, 1)   layer-2 bias scalar, in SMEM
    # o_ref : (TB, 1)  sigmoid outputs for this batch tile

    # Layer 1 on the MXU, f32 accumulation: (TB, D) @ (D, H) -> (TB, H)
    h = jnp.dot(x_ref[...], w1_ref[...], preferred_element_type=jnp.float32)
    h = jnp.maximum(h + bw_ref[0:1, :], jnp.float32(0.0))     # bias + ReLU (VPU)

    # Layer 2 as VPU multiply + lane reduction (XLU): (TB, H) -> (TB, 1).
    z = jnp.sum(h * bw_ref[1:2, :], axis=1, keepdims=True)
    o_ref[...] = jax.nn.sigmoid(z + b2_ref[0, 0])              # EUP exp/recip


def _round_up(n, m):
    return ((n + m - 1) // m) * m


def _vmem_budget():
    """Generation-aware VMEM limit + tile budget (bytes)."""
    try:
        cap = int(getattr(pltpu.get_tpu_info(), "vmem_capacity_bytes", 0)) or (64 << 20)
    except Exception:
        cap = 64 << 20
    limit = (cap * 3) // 4        # ~96 MiB on v5e/v6e (128 MiB), ~48 MiB on v7x (64 MiB)
    budget = (limit * 17) // 20   # ~85% of the limit left for pipeline buffers
    return limit, budget


def _choose_batch_tile(B, D, H, itemsize, budget, block_b=None):
    """Batch tile: big enough for >=~4 MiB of x per step, VMEM-safe, >=2 grid steps."""
    if B <= 8:
        return B                                   # single full-array block
    b_floor = max(8, (B // 8) * 8)                 # largest multiple of 8 <= B
    if block_b is not None:
        target = _round_up(max(block_b, 8), 8)
    else:
        target = _round_up(max((4 << 20) // max(D * itemsize, 1), 8), 8)
    # Keep >= 2 grid steps so the "parallel" batch axis can shard across the
    # two v7x TensorCores (and DMA overlaps compute on all generations).
    tb = max(8, min(target, _round_up(pl.cdiv(B, 2), 8), b_floor))

    def need(t):
        return (3 * t * D * itemsize       # streamed x tile buffers (+headroom)
                + 2 * D * H * itemsize     # resident W1 (worst case 2 buffers)
                + 2 * 2 * H * 4            # resident [b1; w2]
                + 2 * t * 4                # output column buffers
                + 3 * t * H * 4)           # (TB, H) f32 intermediates

    while tb > 8 and need(tb) > budget:
        tb = max(8, _round_up(tb // 2, 8))
    return tb


def discriminator_forward(x, w1, b1, w2, b2, *, block_b=None):
    """Forward pass of Linear(D,128) -> ReLU -> Linear(128,1) -> Sigmoid.

    x : (B, D); w1 : (D, H); b1 : (H,); w2 : (H, 1) or (H,); b2 : scalar.
    Returns (B, 1) f32 probabilities (matches the PyTorch module's output).
    """
    B, D = x.shape
    H = w1.shape[1]
    itemsize = jnp.dtype(x.dtype).itemsize

    vmem_limit, budget = _vmem_budget()
    TB = _choose_batch_tile(B, D, H, itemsize, budget, block_b)
    grid = (pl.cdiv(B, TB),)

    # Weight plumbing only (all tiny / resident): x itself is fed untouched.
    w1c = jnp.asarray(w1, x.dtype)                                    # (D, H)
    bw = jnp.stack([jnp.asarray(b1, jnp.float32).reshape(H),
                    jnp.asarray(w2, jnp.float32).reshape(H)], axis=0)  # (2, H)
    b2s = jnp.asarray(b2, jnp.float32).reshape(1, 1)                  # SMEM scalar

    cost = pl.CostEstimate(
        flops=int(2 * B * D * H + 4 * B * H),
        transcendentals=int(B),
        bytes_accessed=int(itemsize * (B * D + D * H) + 4 * (2 * H + 1 + B)),
    )

    out = pl.pallas_call(
        discriminator_kernel,
        out_shape=jax.ShapeDtypeStruct((B, 1), jnp.float32),
        grid=grid,
        in_specs=[
            pl.BlockSpec((TB, D), lambda i: (i, 0)),            # x tile (streamed)
            pl.BlockSpec((D, H), lambda i: (0, 0)),             # W1 (resident)
            pl.BlockSpec((2, H), lambda i: (0, 0)),             # [b1; w2] (resident)
            pl.BlockSpec(memory_space=pltpu.MemorySpace.SMEM),  # b2 scalar
        ],
        out_specs=pl.BlockSpec((TB, 1), lambda i: (i, 0)),
        compiler_params=pltpu.CompilerParams(
            dimension_semantics=("parallel",),
            vmem_limit_bytes=int(vmem_limit)),
        cost_estimate=cost,
    )(x, w1c, bw, b2s)

    return out


def init_params(key, input_dim, hidden=HIDDEN, out=1):
    # Mirrors torch.nn.Linear default init: U(-1/sqrt(fan_in), 1/sqrt(fan_in)).
    k1, k2, k3, k4 = jax.random.split(key, 4)
    bound1 = 1.0 / (input_dim ** 0.5)
    bound2 = 1.0 / (hidden ** 0.5)
    w1 = jax.random.uniform(k1, (input_dim, hidden), jnp.float32, -bound1, bound1)
    b1 = jax.random.uniform(k2, (hidden,), jnp.float32, -bound1, bound1)
    w2 = jax.random.uniform(k3, (hidden, out), jnp.float32, -bound2, bound2)
    b2 = jax.random.uniform(k4, (out,), jnp.float32, -bound2, bound2)
    return w1, b1, w2, b2


def reference_forward(x, w1, b1, w2, b2):
    h = jnp.maximum(x @ w1 + b1, 0.0)
    return jax.nn.sigmoid(h @ w2 + b2)


if __name__ == "__main__":
    key = jax.random.PRNGKey(0)
    kx1, kx2, kp1, kp2 = jax.random.split(key, 4)

    # Test 1: small shape consistent with the module (batch=64, input_dim=32);
    # tiles to a 2-step "parallel" grid.
    B1, D1 = 64, 32
    x1 = jax.random.normal(kx1, (B1, D1), jnp.float32)
    p1 = init_params(kp1, D1)
    out1 = jax.block_until_ready(discriminator_forward(x1, *p1))
    ref1 = reference_forward(x1, *p1)
    assert out1.shape == (B1, 1)
    assert jnp.allclose(out1, ref1, atol=1e-5, rtol=1e-5), "test1 mismatch"

    # Test 2: batch not a multiple of the tile (exercises Pallas edge-block
    # masking; note there is no wrapper-side padding/copy of x anymore).
    B2, D2 = 300, 48
    x2 = jax.random.normal(kx2, (B2, D2), jnp.float32)
    p2 = init_params(kp2, D2)
    out2 = jax.block_until_ready(discriminator_forward(x2, *p2))
    ref2 = reference_forward(x2, *p2)
    assert out2.shape == (B2, 1)
    assert jnp.allclose(out2, ref2, atol=1e-5, rtol=1e-5), "test2 mismatch"

    print("KERNEL_OK")
</pallas_src>

<mosaic_0001>
module attributes {stable_mosaic.version = 11 : i64} {
  func.func @discriminator_kernel(%arg0: i32, %arg1: memref<32x32xf32, #tpu.memory_space<vmem>>, %arg2: memref<32x128xf32, #tpu.memory_space<vmem>>, %arg3: memref<2x128xf32, #tpu.memory_space<vmem>>, %arg4: memref<1x1xf32, #tpu.memory_space<smem>>, %arg5: memref<32x1xf32, #tpu.memory_space<vmem>>) attributes {dimension_semantics = [#tpu.dimension_semantics<parallel>], iteration_bounds = array<i64: 2>, scalar_prefetch = 0 : i64, scratch_operands = 0 : i64, tpu.core_type = #tpu.core_type<tc>, window_params = [{transform_indices = @transform_0, window_bounds = array<i64: 32, 32>}, {pipeline_mode = #tpu.pipeline_mode<synchronous>, transform_indices = @transform_1, window_bounds = array<i64: 32, 128>}, {pipeline_mode = #tpu.pipeline_mode<synchronous>, transform_indices = @transform_2, window_bounds = array<i64: 2, 128>}, {transform_indices = @transform_3, window_bounds = array<i64: 1, 1>}, {transform_indices = @transform_4, window_bounds = array<i64: 32, 1>}]} {
    %c0 = arith.constant 0 : index
    %c0_0 = arith.constant 0 : index
    %0 = vector.load %arg1[%c0, %c0_0] : memref<32x32xf32, #tpu.memory_space<vmem>>, vector<32x32xf32>
    %c0_1 = arith.constant 0 : index
    %c0_2 = arith.constant 0 : index
    %1 = vector.load %arg2[%c0_1, %c0_2] : memref<32x128xf32, #tpu.memory_space<vmem>>, vector<32x128xf32>
    %cst = arith.constant dense<0.000000e+00> : vector<32x128xf32>
    %2 = tpu.matmul %0, %1, %cst {dimension_numbers = #tpu.dot_dimension_numbers<[1], [0], [0], [1], [0, 0, 1, 1], [], []>} : vector<32x32xf32>, vector<32x128xf32>, vector<32x128xf32> -> vector<32x128xf32>
    %c0_3 = arith.constant 0 : index
    %c0_4 = arith.constant 0 : index
    %3 = vector.load %arg3[%c0_3, %c0_4] : memref<2x128xf32, #tpu.memory_space<vmem>>, vector<1x128xf32>
    %4 = vector.broadcast %3 : vector<1x128xf32> to vector<32x128xf32>
    %5 = arith.addf %2, %4 : vector<32x128xf32>
    %cst_5 = arith.constant 0.000000e+00 : f32
    %6 = vector.broadcast %cst_5 : f32 to vector<32x128xf32>
    %7 = arith.maximumf %5, %6 : vector<32x128xf32>
    %c1 = arith.constant 1 : index
    %c0_6 = arith.constant 0 : index
    %8 = vector.load %arg3[%c1, %c0_6] : memref<2x128xf32, #tpu.memory_space<vmem>>, vector<1x128xf32>
    %9 = vector.broadcast %8 : vector<1x128xf32> to vector<32x128xf32>
    %10 = arith.mulf %7, %9 : vector<32x128xf32>
    %cst_7 = arith.constant dense<0.000000e+00> : vector<32xf32>
    %11 = vector.multi_reduction <add>, %10, %cst_7 [1] : vector<32x128xf32> to vector<32xf32>
    %12 = vector.shape_cast %11 : vector<32xf32> to vector<32x1xf32>
    %c0_8 = arith.constant 0 : index
    %c0_9 = arith.constant 0 : index
    %13 = memref.load %arg4[%c0_8, %c0_9] : memref<1x1xf32, #tpu.memory_space<smem>>
    %14 = vector.broadcast %13 : f32 to vector<32x1xf32>
    %15 = arith.addf %12, %14 : vector<32x1xf32>
    %16 = arith.negf %15 : vector<32x1xf32>
    %17 = math.exp %16 : vector<32x1xf32>
    %cst_10 = arith.constant 1.000000e+00 : f32
    %18 = vector.broadcast %cst_10 : f32 to vector<32x1xf32>
    %19 = arith.addf %18, %17 : vector<32x1xf32>
    %20 = arith.divf %18, %19 : vector<32x1xf32>
    %c0_11 = arith.constant 0 : index
    %c0_12 = arith.constant 0 : index
    %21 = vector.load %arg5[%c0_11, %c0_12] : memref<32x1xf32, #tpu.memory_space<vmem>>, vector<32x1xf32>
    tpu.vector_store %arg5[%c0_11, %c0_12], %20 {strides = array<i32>} : memref<32x1xf32, #tpu.memory_space<vmem>>, vector<32x1xf32>,
    return
  }
  func.func @transform_0(%arg0: i32) -> (i32, i32) {
    %c0_i32 = arith.constant 0 : i32
    %c0_i32_0 = arith.constant 0 : i32
    return %arg0, %c0_i32 : i32, i32
  }
  func.func @transform_1(%arg0: i32) -> (i32, i32) {
    %c0_i32 = arith.constant 0 : i32
    %c0_i32_0 = arith.constant 0 : i32
    %c0_i32_1 = arith.constant 0 : i32
    return %c0_i32, %c0_i32_0 : i32, i32
  }
  func.func @transform_2(%arg0: i32) -> (i32, i32) {
    %c0_i32 = arith.constant 0 : i32
    %c0_i32_0 = arith.constant 0 : i32
    %c0_i32_1 = arith.constant 0 : i32
    return %c0_i32, %c0_i32_0 : i32, i32
  }
  func.func @transform_3(%arg0: i32) -> (i32, i32) {
    %c0_i32 = arith.constant 0 : i32
    %c0_i32_0 = arith.constant 0 : i32
    %c0_i32_1 = arith.constant 0 : i32
    return %c0_i32, %c0_i32_0 : i32, i32
  }
  func.func @transform_4(%arg0: i32) -> (i32, i32) {
    %c0_i32 = arith.constant 0 : i32
    %c0_i32_0 = arith.constant 0 : i32
    return %arg0, %c0_i32 : i32, i32
  }
}

</mosaic_0001>

<llo_original>
// kernel: tpu_custom_call.1
$region0: #{tpu_custom_call.1}
  #allocation0 [shape = 'u32[]', space=smem, size = 0x4, offset = 0x4, fixed_abs, tag = 'smem constant byte address 0x4 - core index']
  #allocation1 [shape = 'u32[144,128]{1,0:T(1,128)}', space=vmem, size = 0x12000, scoped, tag = 'internal scratch']
  #allocation2 [shape = 'f32[1,1]{1,0:T(1,128)S(6)}', space=smem, size = 0x200, scoped, tag = 'scoped memory for tpu_custom_call.1']
  %s0 = inlined_call_operand.vmem [shape: f32[64,32], index: 0, kind: input, shape index: {}]
  %s1 = inlined_call_operand.vmem [shape: f32[32,128], index: 1, kind: input, shape index: {}]
  %s2 = inlined_call_operand.vmem [shape: f32[2,128], index: 2, kind: input, shape index: {}]
  %s3 = inlined_call_operand.<no memory space> [shape: f32[1,1], index: 3, kind: input, shape index: {}]
  %s4 = inlined_call_operand.vmem [shape: f32[64,1], index: 4, kind: output, shape index: {}]
  %s5 = sld [smem:[#allocation0]]
  $region49: #{tpu_custom_call.1} parent=0
    _
  %s7 = ssub.s32 1, %s5
  %s8 = scalar_select 0, %s7, %s5
  %9 = sst [smem:[#allocation2]] %s3
  loop: start=0, step=1, limit=4
  $region2: #{tpu_custom_call.1} parent=0 // loop_pre_header
    _
  $region3: #{tpu_custom_call.1} parent=0 // loop_header
    %s11 = sphi 0, %s15
    %p12 = scmp.ge.s32.totalorder %s11, 4
    %s21 = sphi 0, %s23
    %s24 = sphi 0, %s21
    %s25 = sphi 0, %s24
    %s41 = sphi 0, %s25
    %s45 = sphi 0, %s45
    %s47 = sphi 0, %s45
    %s48 = sphi 0, %s47
    %s62 = sphi 0, %s48
    %s66 = sphi 0, %s66
    %s68 = sphi 0, %s66
    %s69 = sphi 0, %s68
    %s83 = sphi 0, %s69
    %s87 = sphi 0, %s87
    %s89 = sphi 0, %s87
    %s90 = sphi 0, %s89
    %s104 = sphi 0, %s90
    %s110 = sphi 0, %s112
    %s113 = sphi 0, %s110
    %s114 = sphi 0, %s113
    %s130 = sphi 0, %s114
  $region4: #{tpu_custom_call.1} parent=0 // loop_header_branch
    %14 = sbr.rel (%p12) target = $region8
  $region5: #{tpu_custom_call.1} parent=0 // loop_body
    %s16 = ssub.s32 %s11, 1
    %s17 = ssub.s32 %s11, 2
    %s18 = sadd.s32 %s11, 1
    %s19 = ssub.s32 %s11, %s18
    %p20 = scmp.eq.s32.totalorder %s19, 0
    %s22 = sadd.s32 %s21, 1
    %s23 = scalar_select %p20, %s21, %s22
    %p26 = pneg %p20
    %p27 = scmp.eq.s32.totalorder %s11, 1
    %p28 = por %p26, %p27
    %p29 = scmp.ne.s32.totalorder %s21, %s24
    %p30 = scmp.eq.s32.totalorder %s11, 0
    %p31 = por %p29, %p30
    %p32 = scmp.ne.s32.totalorder %s21, %s24
    %p33 = scmp.eq.s32.totalorder %s16, 1
    %p34 = por %p32, %p33
    %p35 = scmp.ne.s32.totalorder %s24, %s25
    %p36 = scmp.eq.s32.totalorder %s16, 0
    %p37 = por %p35, %p36
    %p38 = scmp.ne.s32.totalorder %s24, %s25
    %p39 = scmp.eq.s32.totalorder %s17, 1
    %p40 = por %p38, %p39
    %p42 = scmp.ne.s32.totalorder %s25, %s41
    %p43 = scmp.eq.s32.totalorder %s17, 0
    %p44 = por %p42, %p43
    %s46 = sadd.s32 %s45, 1
    %p49 = scmp.eq.s32.totalorder %s11, 1
    %p50 = scmp.ne.s32.totalorder %s45, %s47
    %p51 = scmp.eq.s32.totalorder %s11, 0
    %p52 = por %p50, %p51
    %p53 = scmp.ne.s32.totalorder %s45, %s47
    %p54 = scmp.eq.s32.totalorder %s16, 1
    %p55 = por %p53, %p54
    %p56 = scmp.ne.s32.totalorder %s47, %s48
    %p57 = scmp.eq.s32.totalorder %s16, 0
    %p58 = por %p56, %p57
    %p59 = scmp.ne.s32.totalorder %s47, %s48
    %p60 = scmp.eq.s32.totalorder %s17, 1
    %p61 = por %p59, %p60
    %p63 = scmp.ne.s32.totalorder %s48, %s62
    %p64 = scmp.eq.s32.totalorder %s17, 0
    %p65 = por %p63, %p64
    %s67 = sadd.s32 %s66, 1
    %p70 = scmp.eq.s32.totalorder %s11, 1
    %p71 = scmp.ne.s32.totalorder %s66, %s68
    %p72 = scmp.eq.s32.totalorder %s11, 0
    %p73 = por %p71, %p72
    %p74 = scmp.ne.s32.totalorder %s66, %s68
    %p75 = scmp.eq.s32.totalorder %s16, 1
    %p76 = por %p74, %p75
    %p77 = scmp.ne.s32.totalorder %s68, %s69
    %p78 = scmp.eq.s32.totalorder %s16, 0
    %p79 = por %p77, %p78
    %p80 = scmp.ne.s32.totalorder %s68, %s69
    %p81 = scmp.eq.s32.totalorder %s17, 1
    %p82 = por %p80, %p81
    %p84 = scmp.ne.s32.totalorder %s69, %s83
    %p85 = scmp.eq.s32.totalorder %s17, 0
    %p86 = por %p84, %p85
    %s88 = sadd.s32 %s87, 1
    %p91 = scmp.eq.s32.totalorder %s11, 1
    %p92 = scmp.ne.s32.totalorder %s87, %s89
    %p93 = scmp.eq.s32.totalorder %s11, 0
    %p94 = por %p92, %p93
    %p95 = scmp.ne.s32.totalorder %s87, %s89
    %p96 = scmp.eq.s32.totalorder %s16, 1
    %p97 = por %p95, %p96
    %p98 = scmp.ne.s32.totalorder %s89, %s90
    %p99 = scmp.eq.s32.totalorder %s16, 0
    %p100 = por %p98, %p99
    %p101 = scmp.ne.s32.totalorder %s89, %s90
    %p102 = scmp.eq.s32.totalorder %s17, 1
    %p103 = por %p101, %p102
    %p105 = scmp.ne.s32.totalorder %s90, %s104
    %p106 = scmp.eq.s32.totalorder %s17, 0
    %p107 = por %p105, %p106
    %s108 = ssub.s32 %s11, %s18
    %p109 = scmp.eq.s32.totalorder %s108, 0
    %s111 = sadd.s32 %s110, 1
    %s112 = scalar_select %p109, %s110, %s111
    %p115 = pneg %p109
    %p116 = scmp.eq.s32.totalorder %s11, 1
    %p117 = por %p115, %p116
    %p118 = scmp.ne.s32.totalorder %s110, %s113
    %p119 = scmp.eq.s32.totalorder %s11, 0
    %p120 = por %p118, %p119
    %p121 = scmp.ne.s32.totalorder %s110, %s113
    %p122 = scmp.eq.s32.totalorder %s16, 1
    %p123 = por %p121, %p122
    %p124 = scmp.ne.s32.totalorder %s113, %s114
    %p125 = scmp.eq.s32.totalorder %s16, 0
    %p126 = por %p124, %p125
    %p127 = scmp.ne.s32.totalorder %s113, %s114
    %p128 = scmp.eq.s32.totalorder %s17, 1
    %p129 = por %p127, %p128
    %p131 = scmp.ne.s32.totalorder %s114, %s130
    %p132 = scmp.eq.s32.totalorder %s17, 0
    %p133 = por %p131, %p132
    %p134 = scmp.le.s32.totalorder 1, %s11
    %p135 = scmp.lt.s32.totalorder %s11, 3
    %p136 = pnand %p134, %p135
    %p137 = pneg %p136
    // Predicated region
    $region9: #{tpu_custom_call.1} parent=5 // pred_check
      _
    $region10: #{tpu_custom_call.1} parent=5 // pred_check_branch
      %139 = sbr.rel (%p136) target = $region12
    $region11: #{tpu_custom_call.1} parent=5 // pred_region
      %s140 = ssub.s32 %s11, 1
      // Predicated region
      $region13: #{tpu_custom_call.1} parent=11 // pred_check
        %p141 = pneg %p58
      $region14: #{tpu_custom_call.1} parent=11 // pred_check_branch
        %143 = sbr.rel (%p141) target = $region16
      $region15: #{tpu_custom_call.1} parent=11 // pred_region
        _
      $region16: #{tpu_custom_call.1} parent=11 // pred_fallthru
        _
      // Predicated region
      $region17: #{tpu_custom_call.1} parent=11 // pred_check
        %p144 = pneg %p79
      $region18: #{tpu_custom_call.1} parent=11 // pred_check_branch
        %146 = sbr.rel (%p144) target = $region20
      $region19: #{tpu_custom_call.1} parent=11 // pred_region
        _
      $region20: #{tpu_custom_call.1} parent=11 // pred_fallthru
        _
      // Predicated region
      $region21: #{tpu_custom_call.1} parent=11 // pred_check
        %p147 = pneg %p100
      $region22: #{tpu_custom_call.1} parent=11 // pred_check_branch
        %149 = sbr.rel (%p147) target = $region24
      $region23: #{tpu_custom_call.1} parent=11 // pred_region
        _
      $region24: #{tpu_custom_call.1} parent=11 // pred_fallthru
        _
    $region12: #{tpu_custom_call.1} parent=5 // pred_fallthru
      _
    %p150 = scmp.lt.s32.totalorder %s11, 2
    // Predicated region
    $region25: #{tpu_custom_call.1} parent=5 // pred_check
      %p151 = pneg %p150
    $region26: #{tpu_custom_call.1} parent=5 // pred_check_branch
      %153 = sbr.rel (%p151) target = $region28
    $region27: #{tpu_custom_call.1} parent=5 // pred_region
      // Predicated region
      $region29: #{tpu_custom_call.1} parent=27 // pred_check
        %p154 = pneg %p31
      $region30: #{tpu_custom_call.1} parent=27 // pred_check_branch
        %156 = sbr.rel (%p154) target = $region32
      $region31: #{tpu_custom_call.1} parent=27 // pred_region
        %s157 = smul.u32 4, %s11
        %p158 = scmp.lt.s32.totalorder %s157, 7
        %s159 = scalar_select %p158, %s157, 7
        %s160 = smul.addr %s159, 8
        %s161 = scalar_lea.vmem %s0, %s160
        %s162 = smul.u32 4, %s11
      $region32: #{tpu_custom_call.1} parent=27 // pred_fallthru
        _
    $region28: #{tpu_custom_call.1} parent=5 // pred_fallthru
      _
    %p163 = scmp.le.s32.totalorder 1, %s11
    %p164 = scmp.lt.s32.totalorder %s11, 3
    %p165 = pnand %p163, %p164
    %p166 = pneg %p165
    // Predicated region
    $region33: #{tpu_custom_call.1} parent=5 // pred_check
      _
    $region34: #{tpu_custom_call.1} parent=5 // pred_check_branch
      %168 = sbr.rel (%p165) target = $region36
    $region35: #{tpu_custom_call.1} parent=5 // pred_region
      %s169 = ssub.s32 %s11, 1
      %s170 = smul.u32 4, %s16
      %p171 = scmp.lt.s32.totalorder %s170, 7
      %s172 = scalar_select %p171, %s170, 7
      %s173 = smul.addr %s172, 8
      %s174 = scalar_lea.vmem %s0, %s173
      %p175 = pneg %p37
      %p176 = pneg %p34
      %p177 = pneg %p58
      %p178 = pneg %p55
      %p179 = pneg %p79
      %p180 = pneg %p76
      %p181 = pneg %p100
      %p182 = pneg %p97
      %p183 = pneg %p126
      %p184 = pneg %p123
      %s185 = smul.u32 4, %s16
      %p186 = scmp.lt.s32.totalorder %s185, 7
      %s187 = scalar_select %p186, %s185, 7
      %s188 = smul.addr %s187, 8
      %s189 = scalar_lea.vmem %s4, %s188
      %s190 = smul.u32 4, %s16
      %p191 = scmp.lt.s32.totalorder %s190, 7
      %s192 = scalar_select %p191, %s190, 7
      %s193 = smul.addr %s192, 8
      %s194 = scalar_lea.vmem %s0, %s193
      %s195 = smul.u32 4, %s16
      %s196 = smul.u32 4, %s16
      %p197 = scmp.lt.s32.totalorder %s196, 7
      %s198 = scalar_select %p197, %s196, 7
      %s199 = smul.addr %s198, 8
      %s200 = scalar_lea.vmem %s4, %s199
      %s201 = smul.u32 4, %s16
      %v202 = vld [vmem:[%s194] sm:$0xff]
      %v203 = vld [vmem:[%s194 + $0x8] sm:$0xff]
      %v204 = vld [vmem:[%s194 + $0x10] sm:$0xff]
      %v205 = vld [vmem:[%s194 + $0x18] sm:$0xff]
      %v206 = vld [vmem:[%s1] sm:$0xff]
      %v207 = vld [vmem:[%s1 + $0x8] sm:$0xff]
      %v208 = vld [vmem:[%s1 + $0x10] sm:$0xff]
      %v209 = vld [vmem:[%s1 + $0x18] sm:$0xff]
      %v210 = vld [vmem:[%s2] sm:$0x1]
      %v211 = vlaneseq
      %v212 = vshrl.u32 %v211, 7
      %v213 = vsub.s32 0, %v212
      %v214 = vrot.slane %v210, %v213
      %vm215 = vcmask 261120
      %v217 = vsel %vm215, %v202, 0
      %v220 = vsel %vm215, %v203, 0
      %v223 = vsel %vm215, %v204, 0
      %v226 = vsel %vm215, %v205, 0
      %228 = vmatprep.subr.mxu0 0.0
      %229 = vmatpush1.msra.mxu0 %v206
      %230 = vmatprep.subr.mxu0 0.0
      %231 = vmatpush1.msra.mxu0 %v207
      %232 = vmatprep.subr.mxu0 0.0
      %233 = vmatpush1.msra.mxu0 %v208
      %234 = vmatprep.subr.mxu0 0.0
      %235 = vmatpush1.msra.mxu0 %v209
      %236 = vmatprep.subr.mxu0 0.0
      %237 = vmatpush1.msra.mxu0 0.0
      %238 = vmatprep.subr.mxu0 0.0
      %239 = vmatpush1.msra.mxu0 0.0
      %240 = vmatprep.subr.mxu0 0.0
      %241 = vmatpush1.msra.mxu0 0.0
      %242 = vmatprep.subr.mxu0 0.0
      %243 = vmatpush1.msra.mxu0 0.0
      %244 = vmatprep.subr.mxu0 0.0
      %245 = vmatpush1.msra.mxu0 0.0
      %246 = vmatprep.subr.mxu0 0.0
      %247 = vmatpush1.msra.mxu0 0.0
      %248 = vmatprep.subr.mxu0 0.0
      %249 = vmatpush1.msra.mxu0 0.0
      %250 = vmatprep.subr.mxu0 0.0
      %251 = vmatpush1.msra.mxu0 0.0
      %252 = vmatprep.subr.mxu0 0.0
      %253 = vmatpush1.msra.mxu0 0.0
      %254 = vmatprep.subr.mxu0 0.0
      %255 = vmatpush1.msra.mxu0 0.0
      %256 = vmatprep.subr.mxu0 0.0
      %257 = vmatpush1.msra.mxu0 0.0
      %258 = vmatprep.subr.mxu0 0.0
      %259 = vmatpush1.msra.mxu0 0.0
      %260 = vmatprep.subr.mxu0 0.0
      %261 = vmatpush1.msra.mxu0 0.0
      %262 = vmatprep.subr.mxu0 0.0
      %263 = vmatpush1.msra.mxu0 0.0
      %264 = vmatprep.subr.mxu0 0.0
      %265 = vmatpush1.msra.mxu0 0.0
      %266 = vmatprep.subr.mxu0 0.0
      %267 = vmatpush1.msra.mxu0 0.0
      %268 = vmatprep.subr.mxu0 0.0
      %269 = vmatpush1.msra.mxu0 0.0
      %270 = vmatprep.subr.mxu0 0.0
      %271 = vmatpush1.msra.mxu0 0.0
      %272 = vmatprep.subr.mxu0 0.0
      %273 = vmatpush1.msra.mxu0 0.0
      %274 = vmatprep.subr.mxu0 0.0
      %275 = vmatpush1.msra.mxu0 0.0
      %276 = vmatprep.subr.mxu0 0.0
      %277 = vmatpush1.msra.mxu0 0.0
      %278 = vmatprep.subr.mxu0 0.0
      %279 = vmatpush1.msra.mxu0 0.0
      %280 = vmatprep.subr.mxu0 0.0
      %281 = vmatpush1.msra.mxu0 0.0
      %282 = vmatprep.subr.mxu0 0.0
      %283 = vmatpush1.msra.mxu0 0.0
      %284 = vmatprep.subr.mxu0 0.0
      %285 = vmatpush1.msra.mxu0 0.0
      %286 = vmatprep.subr.mxu0 0.0
      %287 = vmatpush1.msra.mxu0 0.0
      %288 = vmatprep.subr.mxu0 0.0
      %289 = vmatpush1.msra.mxu0 0.0
      %290 = vmatprep.subr.mxu0 0.0
      %291 = vmatpush1.msra.mxu0 0.0
      %292 = vmatprep.mubr.f32.mxu0 0.0
      %293 = vmatmul.mubr.f32.gmra.mrb[0].mxu0 %v217
      %v294 = vpop.f32.mrb[0].mxu0
      %v295 = vadd.f32 %v214, %v294
      %v296 = vpop.f32.mrb[0].mxu0
      %297 = vmatprep.mubr.f32.mxu0 0.0
      %298 = vmatmul.mubr.f32.gmra.mrb[0].mxu0 %v220
      %v299 = vpop.f32.mrb[0].mxu0
      %v300 = vadd.f32 %v214, %v299
      %v301 = vpop.f32.mrb[0].mxu0
      %302 = vmatprep.mubr.f32.mxu0 0.0
      %303 = vmatmul.mubr.f32.gmra.mrb[0].mxu0 %v223
      %v304 = vpop.f32.mrb[0].mxu0
      %v305 = vadd.f32 %v214, %v304
      %v306 = vpop.f32.mrb[0].mxu0
      %307 = vmatprep.mubr.f32.mxu0 0.0
      %308 = vmatmul.mubr.f32.gmra.mrb[0].mxu0 %v226
      %v309 = vpop.f32.mrb[0].mxu0
      %v310 = vadd.f32 %v214, %v309
      %v311 = vpop.f32.mrb[0].mxu0
      %312 = vdwg.mxu0
      %v313 = vmax.f32 %v295, 0.0
      %v314 = vmax.f32 %v300, 0.0
      %v315 = vmax.f32 %v305, 0.0
      %v316 = vmax.f32 %v310, 0.0
      %v317 = vld [vmem:[%s2 + $0x1] sm:$0x1]
      %v318 = vlaneseq
      %v319 = vshrl.u32 %v318, 7
      %v320 = vsub.s32 0, %v319
      %v321 = vrot.slane %v317, %v320
      %v322 = vmul.f32 %v313, %v321
      %v323 = vmul.f32 %v314, %v321
      %v324 = vmul.f32 %v315, %v321
      %v325 = vmul.f32 %v316, %v321
      %326 = vadd.xlane.f32.xlu0 %v322
      %v327 = vpop.xlane.xlu0 %326
      %328 = vadd.xlane.f32.xlu0 %v323
      %v329 = vpop.xlane.xlu0 %328
      %330 = vadd.xlane.f32.xlu0 %v324
      %v331 = vpop.xlane.xlu0 %330
      %332 = vadd.xlane.f32.xlu0 %v325
      %v333 = vpop.xlane.xlu0 %332
      %s334 = sld [smem:[#allocation2]]
      %v335 = vstv %s334
      %v336 = vadd.f32 %v327, %v335
      %v337 = vadd.f32 %v329, %v335
      %v338 = vadd.f32 %v331, %v335
      %v339 = vadd.f32 %v333, %v335
      %v340 = vxor.u32 %v336, 2147483648
      %v341 = vxor.u32 %v337, 2147483648
      %v342 = vxor.u32 %v338, 2147483648
      %v343 = vxor.u32 %v339, 2147483648
      %v344 = vmul.f32 %v340, 1.442695
      %v345 = vpow.pop %v344
      %v346 = vmul.f32 %v341, 1.442695
      %v347 = vpow.pop %v346
      %v348 = vmul.f32 %v342, 1.442695
      %v349 = vpow.pop %v348
      %v350 = vmul.f32 %v343, 1.442695
      %v351 = vpow.pop %v350
      %v352 = vadd.f32 %v345, 1.0
      %v353 = vadd.f32 %v347, 1.0
      %v354 = vadd.f32 %v349, 1.0
      %v355 = vadd.f32 %v351, 1.0
      %v356 = vrcp.pop %v352
      %v357 = vmul.f32 1.0, %v356
      %v358 = vrcp.pop %v353
      %v359 = vmul.f32 1.0, %v358
      %v360 = vrcp.pop %v354
      %v361 = vmul.f32 1.0, %v360
      %v362 = vrcp.pop %v355
      %v363 = vmul.f32 1.0, %v362
      %vm364 = vcmask 7168
      %365 = vst.msk [vmem:[%s200] sm:$0xff] %vm364, %v357
      %366 = vst.msk [vmem:[%s200 + $0x8] sm:$0xff] %vm364, %v359
      %367 = vst.msk [vmem:[%s200 + $0x10] sm:$0xff] %vm364, %v361
      %368 = vst.msk [vmem:[%s200 + $0x18] sm:$0xff] %vm364, %v363
      %s369 = smul.u32 4, %s16
      %p370 = scmp.lt.s32.totalorder %s369, 7
      %s371 = scalar_select %p370, %s369, 7
      %s372 = smul.addr %s371, 8
      %s373 = scalar_lea.vmem %s4, %s372
      // Predicated region
      $region37: #{tpu_custom_call.1} parent=35 // pred_check
        %p374 = pneg %p123
      $region38: #{tpu_custom_call.1} parent=35 // pred_check_branch
        %376 = sbr.rel (%p374) target = $region40
      $region39: #{tpu_custom_call.1} parent=35 // pred_region
        %s377 = smul.u32 4, %s16
      $region40: #{tpu_custom_call.1} parent=35 // pred_fallthru
        _
    $region36: #{tpu_custom_call.1} parent=5 // pred_fallthru
      _
    %p378 = scmp.le.s32.totalorder 2, %s11
    // Predicated region
    $region41: #{tpu_custom_call.1} parent=5 // pred_check
      %p379 = pneg %p378
    $region42: #{tpu_custom_call.1} parent=5 // pred_check_branch
      %381 = sbr.rel (%p379) target = $region44
    $region43: #{tpu_custom_call.1} parent=5 // pred_region
      %s382 = ssub.s32 %s11, 2
      // Predicated region
      $region45: #{tpu_custom_call.1} parent=43 // pred_check
        %p383 = pneg %p129
      $region46: #{tpu_custom_call.1} parent=43 // pred_check_branch
        %385 = sbr.rel (%p383) target = $region48
      $region47: #{tpu_custom_call.1} parent=43 // pred_region
        %s386 = smul.u32 4, %s17
        %p387 = scmp.lt.s32.totalorder %s386, 7
        %s388 = scalar_select %p387, %s386, 7
        %s389 = smul.addr %s388, 8
        %s390 = scalar_lea.vmem %s4, %s389
      $region48: #{tpu_custom_call.1} parent=43 // pred_fallthru
        _
    $region44: #{tpu_custom_call.1} parent=5 // pred_fallthru
      _
  $region6: #{tpu_custom_call.1} parent=0 // loop_footer
    %s15 = sadd.s32 1, %s11
  $region7: #{tpu_custom_call.1} parent=0 // loop_footer_branch
    %10 = sbr.rel target = $region3
  $region8: #{tpu_custom_call.1} parent=0 // loop_exit
    _

</llo_original>
